<compile_context>
chip_gen: v7x
topology: tpu7x:2x2x1
jax: 0.10.0
libtpu: 0.0.40
codegen_flags: <defaults>
</compile_context>

<pallas_src>
import jax
import jax.numpy as jnp
from jax.experimental import pallas as pl
from jax.experimental.pallas import tpu as pltpu


def _round_up(x, m):
    return ((x + m - 1) // m) * m


# ----------------------------------------------------------------------------
# Kernel: one batch tile per grid step, weights VMEM-resident across the grid.
# ----------------------------------------------------------------------------
def _fusion_kernel(img_ref, gene_ref, clin_ref,
                   w_img_ref, w_gene_ref, w_clin_ref, b_enc_ref,
                   w_fuse_ref, b_fuse_ref, w_head_ref, out_ref):
    f32 = jnp.float32
    hp = w_img_ref.shape[1]          # padded hidden width (lane-aligned)
    wdt = w_fuse_ref.dtype           # bf16

    # Per-modality encoders: bf16 MXU matmul, f32 accumulation, VPU bias+ReLU.
    h_img = jnp.maximum(
        jnp.dot(img_ref[...], w_img_ref[...], preferred_element_type=f32)
        + b_enc_ref[0:1, :], 0.0)
    h_gene = jnp.maximum(
        jnp.dot(gene_ref[...], w_gene_ref[...], preferred_element_type=f32)
        + b_enc_ref[1:2, :], 0.0)
    h_clin = jnp.maximum(
        jnp.dot(clin_ref[...], w_clin_ref[...], preferred_element_type=f32)
        + b_enc_ref[2:3, :], 0.0)

    # Fusion Linear(3H, H): w_fuse is three stacked (Hp, Hp) blocks, so the
    # concat of the encoder outputs never materializes (static ref slices).
    f_pre = (
        jnp.dot(h_img.astype(wdt), w_fuse_ref[0:hp, :],
                preferred_element_type=f32)
        + jnp.dot(h_gene.astype(wdt), w_fuse_ref[hp:2 * hp, :],
                  preferred_element_type=f32)
        + jnp.dot(h_clin.astype(wdt), w_fuse_ref[2 * hp:3 * hp, :],
                  preferred_element_type=f32)
        + b_fuse_ref[...]
    )
    f = jnp.maximum(f_pre, 0.0)      # f[:, hidden] == 1 (constant-1 lane)

    # Head Linear(H, 1) + bias (folded into the constant-1 lane of f) as a
    # VPU broadcast-multiply + lane reduction (no N=1 MXU matmul).
    out_ref[...] = jnp.sum(
        f * w_head_ref[...], axis=-1, keepdims=True
    ).astype(out_ref.dtype)


# ----------------------------------------------------------------------------
# Wrapper: batch-tiled pallas_call; weights stay resident across grid steps.
# ----------------------------------------------------------------------------
def multimodal_forward(image_features, gene_expression, clinical_data,
                       packed, tile_b=256):
    """Pallas-backed forward pass of the wrapped multimodal model."""
    w_img, w_gene, w_clin, b_enc, w_fuse, b_fuse, w_head = packed

    B = image_features.shape[0]
    tb = min(tile_b, _round_up(max(B, 1), 8))   # multiple of 8, capped at 256
    b_pad = _round_up(B, tb)

    def prep(x):
        x = x.astype(jnp.bfloat16)
        if b_pad != B:
            x = jnp.pad(x, ((0, b_pad - B), (0, 0)))
        return x

    img = prep(image_features)
    gene = prep(gene_expression)
    clin = prep(clinical_data)

    d_img, d_gene, d_clin = img.shape[1], gene.shape[1], clin.shape[1]
    hp = w_img.shape[1]
    grid = (b_pad // tb,)

    # Inputs stream per-tile; weights use a constant block index so they are
    # fetched once and stay VMEM-resident for the whole grid.
    in_specs = [
        pl.BlockSpec((tb, d_img), lambda i: (i, 0)),
        pl.BlockSpec((tb, d_gene), lambda i: (i, 0)),
        pl.BlockSpec((tb, d_clin), lambda i: (i, 0)),
        pl.BlockSpec(w_img.shape, lambda i: (0, 0)),
        pl.BlockSpec(w_gene.shape, lambda i: (0, 0)),
        pl.BlockSpec(w_clin.shape, lambda i: (0, 0)),
        pl.BlockSpec(b_enc.shape, lambda i: (0, 0)),
        pl.BlockSpec(w_fuse.shape, lambda i: (0, 0)),
        pl.BlockSpec(b_fuse.shape, lambda i: (0, 0)),
        pl.BlockSpec(w_head.shape, lambda i: (0, 0)),
    ]
    out_specs = pl.BlockSpec((tb, 1), lambda i: (i, 0))

    flops = 2 * b_pad * ((d_img + d_gene + d_clin) * hp + 3 * hp * hp + hp)
    bytes_accessed = (
        2 * (img.size + gene.size + clin.size
             + w_img.size + w_gene.size + w_clin.size + w_fuse.size)
        + 4 * (b_enc.size + b_fuse.size + w_head.size + b_pad)
    )

    out = pl.pallas_call(
        _fusion_kernel,
        out_shape=jax.ShapeDtypeStruct((b_pad, 1), jnp.float32),
        grid=grid,
        in_specs=in_specs,
        out_specs=out_specs,
        compiler_params=pltpu.CompilerParams(
            dimension_semantics=("parallel",)),
        cost_estimate=pl.CostEstimate(
            flops=int(flops), transcendentals=0,
            bytes_accessed=int(bytes_accessed)),
    )(img, gene, clin, w_img, w_gene, w_clin, b_enc, w_fuse, b_fuse, w_head)

    return out[:B]


# ----------------------------------------------------------------------------
# Parameter construction & one-time packing into lane-aligned bf16 slabs.
# ----------------------------------------------------------------------------
def init_params(key, d_img, d_gene, d_clin, hidden):
    ks = jax.random.split(key, 9)
    s = 0.05
    return {
        "w_img":  s * jax.random.normal(ks[0], (d_img, hidden), jnp.float32),
        "b_img":  s * jax.random.normal(ks[1], (hidden,), jnp.float32),
        "w_gene": s * jax.random.normal(ks[2], (d_gene, hidden), jnp.float32),
        "b_gene": s * jax.random.normal(ks[3], (hidden,), jnp.float32),
        "w_clin": s * jax.random.normal(ks[4], (d_clin, hidden), jnp.float32),
        "b_clin": s * jax.random.normal(ks[5], (hidden,), jnp.float32),
        "wf":     s * jax.random.normal(ks[6], (3 * hidden, hidden), jnp.float32),
        "bf":     s * jax.random.normal(ks[7], (hidden,), jnp.float32),
        "w_out":  s * jax.random.normal(ks[8], (hidden, 1), jnp.float32),
        "b_out":  jnp.array([0.1], jnp.float32),
    }


def pack_params(p, hidden):
    """Pack weights into lane-aligned bf16 slabs (done once, off hot path)."""
    hp = _round_up(hidden + 1, 128)   # +1 guarantees a spare constant-1 lane

    def pad_cols(w):                  # (D, hidden) -> (D, hp) bf16
        return jnp.pad(w, ((0, 0), (0, hp - hidden))).astype(jnp.bfloat16)

    w_img = pad_cols(p["w_img"])
    w_gene = pad_cols(p["w_gene"])
    w_clin = pad_cols(p["w_clin"])

    # Encoder bias rows (f32; added on VPU after the f32-accumulated dot).
    b_enc = jnp.zeros((3, hp), jnp.float32)
    b_enc = b_enc.at[0, :hidden].set(p["b_img"])
    b_enc = b_enc.at[1, :hidden].set(p["b_gene"])
    b_enc = b_enc.at[2, :hidden].set(p["b_clin"])

    # Fusion weight as three stacked (hp, hp) blocks (one per modality).
    w_fuse = jnp.zeros((3 * hp, hp), jnp.float32)
    w_fuse = w_fuse.at[0:hidden, :hidden].set(p["wf"][0:hidden])
    w_fuse = w_fuse.at[hp:hp + hidden, :hidden].set(p["wf"][hidden:2 * hidden])
    w_fuse = w_fuse.at[2 * hp:2 * hp + hidden, :hidden].set(
        p["wf"][2 * hidden:3 * hidden])
    w_fuse = w_fuse.astype(jnp.bfloat16)

    # Fusion bias row; lane `hidden` carries a constant 1 (ReLU(1) = 1) so the
    # head bias can be folded into the head weight row.
    b_fuse = jnp.zeros((1, hp), jnp.float32)
    b_fuse = b_fuse.at[0, :hidden].set(p["bf"])
    b_fuse = b_fuse.at[0, hidden].set(1.0)

    # Head row: [w_out.T | b_out at the constant-1 lane | zeros].
    w_head = jnp.zeros((1, hp), jnp.float32)
    w_head = w_head.at[0, :hidden].set(p["w_out"][:, 0])
    w_head = w_head.at[0, hidden].set(p["b_out"][0])

    return w_img, w_gene, w_clin, b_enc, w_fuse, b_fuse, w_head


class ModelWrapper:
    """Mirrors the PyTorch ModelWrapper: forwards the three modalities."""

    def __init__(self, packed_params):
        self.packed = packed_params

    def __call__(self, image_features, gene_expression, clinical_data):
        return multimodal_forward(
            image_features, gene_expression, clinical_data, self.packed
        )


# TODO(synk): the wrapped `model` in the original PyTorch ModelWrapper is
# unspecified; a canonical multimodal-fusion MLP is realized here.

if __name__ == "__main__":
    B, D_IMG, D_GENE, D_CLIN, HIDDEN = 2, 64, 128, 16, 32

    key = jax.random.PRNGKey(0)
    k_img, k_gene, k_clin, k_params = jax.random.split(key, 4)

    image_features = jax.random.normal(k_img, (B, D_IMG), jnp.float32)
    gene_expression = jax.random.normal(k_gene, (B, D_GENE), jnp.float32)
    clinical_data = jax.random.normal(k_clin, (B, D_CLIN), jnp.float32)

    params = init_params(k_params, D_IMG, D_GENE, D_CLIN, HIDDEN)
    packed = pack_params(params, HIDDEN)
    wrapper = ModelWrapper(packed)

    out = wrapper(image_features, gene_expression, clinical_data)
    jax.block_until_ready(out)

    # Pure-JAX reference on the ORIGINAL (unpacked, f32) parameterization.
    def ref(xi, xg, xc, p):
        hi = jnp.maximum(xi @ p["w_img"] + p["b_img"], 0.0)
        hg = jnp.maximum(xg @ p["w_gene"] + p["b_gene"], 0.0)
        hc = jnp.maximum(xc @ p["w_clin"] + p["b_clin"], 0.0)
        h = jnp.concatenate([hi, hg, hc], axis=1)
        f = jnp.maximum(h @ p["wf"] + p["bf"], 0.0)
        return f @ p["w_out"] + p["b_out"]

    expected = ref(image_features, gene_expression, clinical_data, params)
    assert out.shape == (B, 1)
    # Tolerance loosened for bf16 operands (accumulation stays f32 on MXU).
    assert jnp.allclose(out, expected, atol=2e-2, rtol=2e-2), (
        f"mismatch: {out} vs {expected}"
    )

    print("KERNEL_OK")
</pallas_src>

<mosaic_0001>
module attributes {stable_mosaic.version = 11 : i64} {
  func.func @_fusion_kernel(%arg0: i32, %arg1: memref<8x64xbf16, #tpu.memory_space<vmem>>, %arg2: memref<8x128xbf16, #tpu.memory_space<vmem>>, %arg3: memref<8x16xbf16, #tpu.memory_space<vmem>>, %arg4: memref<64x128xbf16, #tpu.memory_space<vmem>>, %arg5: memref<128x128xbf16, #tpu.memory_space<vmem>>, %arg6: memref<16x128xbf16, #tpu.memory_space<vmem>>, %arg7: memref<3x128xf32, #tpu.memory_space<vmem>>, %arg8: memref<384x128xbf16, #tpu.memory_space<vmem>>, %arg9: memref<1x128xf32, #tpu.memory_space<vmem>>, %arg10: memref<1x128xf32, #tpu.memory_space<vmem>>, %arg11: memref<8x1xf32, #tpu.memory_space<vmem>>) attributes {dimension_semantics = [#tpu.dimension_semantics<parallel>], iteration_bounds = array<i64: 1>, scalar_prefetch = 0 : i64, scratch_operands = 0 : i64, tpu.core_type = #tpu.core_type<tc>, window_params = [{transform_indices = @transform_0, window_bounds = array<i64: 8, 64>}, {transform_indices = @transform_1, window_bounds = array<i64: 8, 128>}, {transform_indices = @transform_2, window_bounds = array<i64: 8, 16>}, {pipeline_mode = #tpu.pipeline_mode<synchronous>, transform_indices = @transform_3, window_bounds = array<i64: 64, 128>}, {pipeline_mode = #tpu.pipeline_mode<synchronous>, transform_indices = @transform_4, window_bounds = array<i64: 128, 128>}, {pipeline_mode = #tpu.pipeline_mode<synchronous>, transform_indices = @transform_5, window_bounds = array<i64: 16, 128>}, {pipeline_mode = #tpu.pipeline_mode<synchronous>, transform_indices = @transform_6, window_bounds = array<i64: 3, 128>}, {pipeline_mode = #tpu.pipeline_mode<synchronous>, transform_indices = @transform_7, window_bounds = array<i64: 384, 128>}, {pipeline_mode = #tpu.pipeline_mode<synchronous>, transform_indices = @transform_8, window_bounds = array<i64: 1, 128>}, {pipeline_mode = #tpu.pipeline_mode<synchronous>, transform_indices = @transform_9, window_bounds = array<i64: 1, 128>}, {transform_indices = @transform_10, window_bounds = array<i64: 8, 1>}]} {
    %c0 = arith.constant 0 : index
    %c0_0 = arith.constant 0 : index
    %0 = vector.load %arg1[%c0, %c0_0] : memref<8x64xbf16, #tpu.memory_space<vmem>>, vector<8x64xbf16>
    %c0_1 = arith.constant 0 : index
    %c0_2 = arith.constant 0 : index
    %1 = vector.load %arg4[%c0_1, %c0_2] : memref<64x128xbf16, #tpu.memory_space<vmem>>, vector<64x128xbf16>
    %cst = arith.constant dense<0.000000e+00> : vector<8x128xf32>
    %2 = tpu.matmul %0, %1, %cst {dimension_numbers = #tpu.dot_dimension_numbers<[1], [0], [0], [1], [0, 0, 1, 1], [], []>} : vector<8x64xbf16>, vector<64x128xbf16>, vector<8x128xf32> -> vector<8x128xf32>
    %c0_3 = arith.constant 0 : index
    %c0_4 = arith.constant 0 : index
    %3 = vector.load %arg7[%c0_3, %c0_4] : memref<3x128xf32, #tpu.memory_space<vmem>>, vector<1x128xf32>
    %4 = vector.broadcast %3 : vector<1x128xf32> to vector<8x128xf32>
    %5 = arith.addf %2, %4 : vector<8x128xf32>
    %cst_5 = arith.constant 0.000000e+00 : f32
    %6 = vector.broadcast %cst_5 : f32 to vector<8x128xf32>
    %7 = arith.maximumf %5, %6 : vector<8x128xf32>
    %c0_6 = arith.constant 0 : index
    %c0_7 = arith.constant 0 : index
    %8 = vector.load %arg2[%c0_6, %c0_7] : memref<8x128xbf16, #tpu.memory_space<vmem>>, vector<8x128xbf16>
    %c0_8 = arith.constant 0 : index
    %c0_9 = arith.constant 0 : index
    %9 = vector.load %arg5[%c0_8, %c0_9] : memref<128x128xbf16, #tpu.memory_space<vmem>>, vector<128x128xbf16>
    %cst_10 = arith.constant dense<0.000000e+00> : vector<8x128xf32>
    %10 = tpu.matmul %8, %9, %cst_10 {dimension_numbers = #tpu.dot_dimension_numbers<[1], [0], [0], [1], [0, 0, 1, 1], [], []>} : vector<8x128xbf16>, vector<128x128xbf16>, vector<8x128xf32> -> vector<8x128xf32>
    %c1 = arith.constant 1 : index
    %c0_11 = arith.constant 0 : index
    %11 = vector.load %arg7[%c1, %c0_11] : memref<3x128xf32, #tpu.memory_space<vmem>>, vector<1x128xf32>
    %12 = vector.broadcast %11 : vector<1x128xf32> to vector<8x128xf32>
    %13 = arith.addf %10, %12 : vector<8x128xf32>
    %cst_12 = arith.constant 0.000000e+00 : f32
    %14 = vector.broadcast %cst_12 : f32 to vector<8x128xf32>
    %15 = arith.maximumf %13, %14 : vector<8x128xf32>
    %c0_13 = arith.constant 0 : index
    %c0_14 = arith.constant 0 : index
    %16 = vector.load %arg3[%c0_13, %c0_14] : memref<8x16xbf16, #tpu.memory_space<vmem>>, vector<8x16xbf16>
    %c0_15 = arith.constant 0 : index
    %c0_16 = arith.constant 0 : index
    %17 = vector.load %arg6[%c0_15, %c0_16] : memref<16x128xbf16, #tpu.memory_space<vmem>>, vector<16x128xbf16>
    %cst_17 = arith.constant dense<0.000000e+00> : vector<8x128xf32>
    %18 = tpu.matmul %16, %17, %cst_17 {dimension_numbers = #tpu.dot_dimension_numbers<[1], [0], [0], [1], [0, 0, 1, 1], [], []>} : vector<8x16xbf16>, vector<16x128xbf16>, vector<8x128xf32> -> vector<8x128xf32>
    %c2 = arith.constant 2 : index
    %c0_18 = arith.constant 0 : index
    %19 = vector.load %arg7[%c2, %c0_18] : memref<3x128xf32, #tpu.memory_space<vmem>>, vector<1x128xf32>
    %20 = vector.broadcast %19 : vector<1x128xf32> to vector<8x128xf32>
    %21 = arith.addf %18, %20 : vector<8x128xf32>
    %cst_19 = arith.constant 0.000000e+00 : f32
    %22 = vector.broadcast %cst_19 : f32 to vector<8x128xf32>
    %23 = arith.maximumf %21, %22 : vector<8x128xf32>
    %24 = arith.truncf %7 : vector<8x128xf32> to vector<8x128xbf16>
    %c0_20 = arith.constant 0 : index
    %c0_21 = arith.constant 0 : index
    %25 = vector.load %arg8[%c0_20, %c0_21] : memref<384x128xbf16, #tpu.memory_space<vmem>>, vector<128x128xbf16>
    %cst_22 = arith.constant dense<0.000000e+00> : vector<8x128xf32>
    %26 = tpu.matmul %24, %25, %cst_22 {dimension_numbers = #tpu.dot_dimension_numbers<[1], [0], [0], [1], [0, 0, 1, 1], [], []>} : vector<8x128xbf16>, vector<128x128xbf16>, vector<8x128xf32> -> vector<8x128xf32>
    %27 = arith.truncf %15 : vector<8x128xf32> to vector<8x128xbf16>
    %c128 = arith.constant 128 : index
    %c0_23 = arith.constant 0 : index
    %28 = vector.load %arg8[%c128, %c0_23] : memref<384x128xbf16, #tpu.memory_space<vmem>>, vector<128x128xbf16>
    %cst_24 = arith.constant dense<0.000000e+00> : vector<8x128xf32>
    %29 = tpu.matmul %27, %28, %cst_24 {dimension_numbers = #tpu.dot_dimension_numbers<[1], [0], [0], [1], [0, 0, 1, 1], [], []>} : vector<8x128xbf16>, vector<128x128xbf16>, vector<8x128xf32> -> vector<8x128xf32>
    %30 = arith.addf %26, %29 : vector<8x128xf32>
    %31 = arith.truncf %23 : vector<8x128xf32> to vector<8x128xbf16>
    %c256 = arith.constant 256 : index
    %c0_25 = arith.constant 0 : index
    %32 = vector.load %arg8[%c256, %c0_25] : memref<384x128xbf16, #tpu.memory_space<vmem>>, vector<128x128xbf16>
    %cst_26 = arith.constant dense<0.000000e+00> : vector<8x128xf32>
    %33 = tpu.matmul %31, %32, %cst_26 {dimension_numbers = #tpu.dot_dimension_numbers<[1], [0], [0], [1], [0, 0, 1, 1], [], []>} : vector<8x128xbf16>, vector<128x128xbf16>, vector<8x128xf32> -> vector<8x128xf32>
    %34 = arith.addf %30, %33 : vector<8x128xf32>
    %c0_27 = arith.constant 0 : index
    %c0_28 = arith.constant 0 : index
    %35 = vector.load %arg9[%c0_27, %c0_28] : memref<1x128xf32, #tpu.memory_space<vmem>>, vector<1x128xf32>
    %36 = vector.broadcast %35 : vector<1x128xf32> to vector<8x128xf32>
    %37 = arith.addf %34, %36 : vector<8x128xf32>
    %cst_29 = arith.constant 0.000000e+00 : f32
    %38 = vector.broadcast %cst_29 : f32 to vector<8x128xf32>
    %39 = arith.maximumf %37, %38 : vector<8x128xf32>
    %c0_30 = arith.constant 0 : index
    %c0_31 = arith.constant 0 : index
    %40 = vector.load %arg10[%c0_30, %c0_31] : memref<1x128xf32, #tpu.memory_space<vmem>>, vector<1x128xf32>
    %41 = vector.broadcast %40 : vector<1x128xf32> to vector<8x128xf32>
    %42 = arith.mulf %39, %41 : vector<8x128xf32>
    %cst_32 = arith.constant dense<0.000000e+00> : vector<8xf32>
    %43 = vector.multi_reduction <add>, %42, %cst_32 [1] : vector<8x128xf32> to vector<8xf32>
    %44 = vector.shape_cast %43 : vector<8xf32> to vector<8x1xf32>
    %c0_33 = arith.constant 0 : index
    %c0_34 = arith.constant 0 : index
    %45 = vector.load %arg11[%c0_33, %c0_34] : memref<8x1xf32, #tpu.memory_space<vmem>>, vector<8x1xf32>
    tpu.vector_store %arg11[%c0_33, %c0_34], %44 {strides = array<i32>} : memref<8x1xf32, #tpu.memory_space<vmem>>, vector<8x1xf32>,
    return
  }
  func.func @transform_0(%arg0: i32) -> (i32, i32) {
    %c0_i32 = arith.constant 0 : i32
    %c0_i32_0 = arith.constant 0 : i32
    return %arg0, %c0_i32 : i32, i32
  }
  func.func @transform_1(%arg0: i32) -> (i32, i32) {
    %c0_i32 = arith.constant 0 : i32
    %c0_i32_0 = arith.constant 0 : i32
    return %arg0, %c0_i32 : i32, i32
  }
  func.func @transform_2(%arg0: i32) -> (i32, i32) {
    %c0_i32 = arith.constant 0 : i32
    %c0_i32_0 = arith.constant 0 : i32
    return %arg0, %c0_i32 : i32, i32
  }
  func.func @transform_3(%arg0: i32) -> (i32, i32) {
    %c0_i32 = arith.constant 0 : i32
    %c0_i32_0 = arith.constant 0 : i32
    %c0_i32_1 = arith.constant 0 : i32
    return %c0_i32, %c0_i32_0 : i32, i32
  }
  func.func @transform_4(%arg0: i32) -> (i32, i32) {
    %c0_i32 = arith.constant 0 : i32
    %c0_i32_0 = arith.constant 0 : i32
    %c0_i32_1 = arith.constant 0 : i32
    return %c0_i32, %c0_i32_0 : i32, i32
  }
  func.func @transform_5(%arg0: i32) -> (i32, i32) {
    %c0_i32 = arith.constant 0 : i32
    %c0_i32_0 = arith.constant 0 : i32
    %c0_i32_1 = arith.constant 0 : i32
    return %c0_i32, %c0_i32_0 : i32, i32
  }
  func.func @transform_6(%arg0: i32) -> (i32, i32) {
    %c0_i32 = arith.constant 0 : i32
    %c0_i32_0 = arith.constant 0 : i32
    %c0_i32_1 = arith.constant 0 : i32
    return %c0_i32, %c0_i32_0 : i32, i32
  }
  func.func @transform_7(%arg0: i32) -> (i32, i32) {
    %c0_i32 = arith.constant 0 : i32
    %c0_i32_0 = arith.constant 0 : i32
    %c0_i32_1 = arith.constant 0 : i32
    return %c0_i32, %c0_i32_0 : i32, i32
  }
  func.func @transform_8(%arg0: i32) -> (i32, i32) {
    %c0_i32 = arith.constant 0 : i32
    %c0_i32_0 = arith.constant 0 : i32
    %c0_i32_1 = arith.constant 0 : i32
    return %c0_i32, %c0_i32_0 : i32, i32
  }
  func.func @transform_9(%arg0: i32) -> (i32, i32) {
    %c0_i32 = arith.constant 0 : i32
    %c0_i32_0 = arith.constant 0 : i32
    %c0_i32_1 = arith.constant 0 : i32
    return %c0_i32, %c0_i32_0 : i32, i32
  }
  func.func @transform_10(%arg0: i32) -> (i32, i32) {
    %c0_i32 = arith.constant 0 : i32
    %c0_i32_0 = arith.constant 0 : i32
    return %arg0, %c0_i32 : i32, i32
  }
}

</mosaic_0001>

<llo_original>
// kernel: tpu_custom_call.1
$region0: #{tpu_custom_call.1}
  #allocation0 [shape = 'u32[]', space=smem, size = 0x4, offset = 0x4, fixed_abs, tag = 'smem constant byte address 0x4 - core index']
  #allocation1 [shape = 'u32[144,128]{1,0:T(1,128)}', space=vmem, size = 0x12000, scoped, tag = 'internal scratch']
  %s0 = inlined_call_operand.hbm [shape: bf16[8,64], index: 0, kind: input, shape index: {}]
  %s1 = inlined_call_operand.hbm [shape: bf16[8,128], index: 1, kind: input, shape index: {}]
  %s2 = inlined_call_operand.vmem [shape: bf16[8,16], index: 2, kind: input, shape index: {}]
  %s3 = inlined_call_operand.hbm [shape: bf16[64,128], index: 3, kind: input, shape index: {}]
  %s4 = inlined_call_operand.hbm [shape: bf16[128,128], index: 4, kind: input, shape index: {}]
  %s5 = inlined_call_operand.vmem [shape: bf16[16,128], index: 5, kind: input, shape index: {}]
  %s6 = inlined_call_operand.vmem [shape: f32[3,128], index: 6, kind: input, shape index: {}]
  %s7 = inlined_call_operand.hbm [shape: bf16[384,128], index: 7, kind: input, shape index: {}]
  %s8 = inlined_call_operand.vmem [shape: f32[1,128], index: 8, kind: input, shape index: {}]
  %s9 = inlined_call_operand.vmem [shape: f32[1,128], index: 9, kind: input, shape index: {}]
  %s10 = inlined_call_operand.vmem [shape: f32[8,1], index: 10, kind: output, shape index: {}]
  %s11 = sld [smem:[#allocation0]]
  $region70: #{tpu_custom_call.1} parent=0
    _
  %s13 = ssub.s32 1, %s11
  %s14 = scalar_select 0, %s13, %s11
  $region1: #{tpu_custom_call.1} parent=0
    #allocation2 [shape = 'u8[2048]{0}', space=vmem, size = 0x800, scoped, tag = 'input window, operand 0, single buffered']
    #allocation3 [shape = 's32[1]{0}', space=sflag, size = 0x4, scoped, tag = 'scoped memory for tpu_custom_call.1']
    #allocation4 [shape = 'u8[2048]{0}', space=vmem, size = 0x800, scoped, tag = 'input window, operand 1, single buffered']
    #allocation5 [shape = 's32[1]{0}', space=sflag, size = 0x4, scoped, tag = 'scoped memory for tpu_custom_call.1']
    #allocation6 [shape = 'u8[16384]{0}', space=vmem, size = 0x4000, scoped, tag = 'input window, operand 3, single buffered']
    #allocation7 [shape = 'u8[32768]{0}', space=vmem, size = 0x8000, scoped, tag = 'input window, operand 4, single buffered']
    #allocation8 [shape = 's32[1]{0}', space=sflag, size = 0x4, scoped, tag = 'scoped memory for tpu_custom_call.1']
    #allocation9 [shape = 'u8[98304]{0}', space=vmem, size = 0x18000, scoped, tag = 'input window, operand 7, single buffered']
    %15 = vsyncpa [#allocation3], 0
    %16 = vsyncpa [#allocation5], 0
    %17 = vsyncpa [#allocation8], 0
    // Predicated region
    $region2: #{tpu_custom_call.1} parent=1 // pred_check
      _
    $region3: #{tpu_custom_call.1} parent=1 // pred_check_branch
      %19 = sbr.rel (0) target = $region5
    $region4: #{tpu_custom_call.1} parent=1 // pred_region
      %s21 = ssub.s32 64, 64
      %22 = vsyncadd [#allocation3], %s21
      %s24 = sshll.u32 [#allocation2], 4
      %s25 = int_to_ptr.vmem [resolvable:$true] %s24
      %27 = dma.hbm_to_vmem [thread:$0]  %s0, 64, %s25, [#allocation3]
    $region5: #{tpu_custom_call.1} parent=1 // pred_fallthru
      _
    // Predicated region
    $region6: #{tpu_custom_call.1} parent=1 // pred_check
      _
    $region7: #{tpu_custom_call.1} parent=1 // pred_check_branch
      %29 = sbr.rel (0) target = $region9
    $region8: #{tpu_custom_call.1} parent=1 // pred_region
      %s31 = ssub.s32 64, 64
      %32 = vsyncadd [#allocation5], %s31
      %s34 = sshll.u32 [#allocation4], 4
      %s35 = int_to_ptr.vmem [resolvable:$true] %s34
      %37 = dma.hbm_to_vmem [thread:$0]  %s1, 64, %s35, [#allocation5]
    $region9: #{tpu_custom_call.1} parent=1 // pred_fallthru
      _
    // Predicated region
    $region10: #{tpu_custom_call.1} parent=1 // pred_check
      _
    $region11: #{tpu_custom_call.1} parent=1 // pred_check_branch
      %39 = sbr.rel (0) target = $region13
    $region12: #{tpu_custom_call.1} parent=1 // pred_region
      _
    $region13: #{tpu_custom_call.1} parent=1 // pred_fallthru
      _
    // Predicated region
    $region14: #{tpu_custom_call.1} parent=1 // pred_check
      _
    $region15: #{tpu_custom_call.1} parent=1 // pred_check_branch
      %41 = sbr.rel (0) target = $region17
    $region16: #{tpu_custom_call.1} parent=1 // pred_region
      %s43 = ssub.s32 512, 512
      %44 = vsyncadd [#allocation5], %s43
      %s45 = sshll.u32 [#allocation6], 4
      %s46 = int_to_ptr.vmem [resolvable:$true] %s45
      %51 = dma.hbm_to_vmem [thread:$0]  %s3, 512, %s46, [#allocation5], 64, 64, 4
    $region17: #{tpu_custom_call.1} parent=1 // pred_fallthru
      _
    // Predicated region
    $region18: #{tpu_custom_call.1} parent=1 // pred_check
      _
    $region19: #{tpu_custom_call.1} parent=1 // pred_check_branch
      %53 = sbr.rel (0) target = $region21
    $region20: #{tpu_custom_call.1} parent=1 // pred_region
      %s55 = ssub.s32 1024, 1024
      %56 = vsyncadd [#allocation8], %s55
      %s57 = sshll.u32 [#allocation7], 4
      %s58 = int_to_ptr.vmem [resolvable:$true] %s57
      %63 = dma.hbm_to_vmem [thread:$0]  %s4, 1024, %s58, [#allocation8], 64, 64, 4
    $region21: #{tpu_custom_call.1} parent=1 // pred_fallthru
      _
    // Predicated region
    $region22: #{tpu_custom_call.1} parent=1 // pred_check
      _
    $region23: #{tpu_custom_call.1} parent=1 // pred_check_branch
      %65 = sbr.rel (0) target = $region25
    $region24: #{tpu_custom_call.1} parent=1 // pred_region
      _
    $region25: #{tpu_custom_call.1} parent=1 // pred_fallthru
      _
    // Predicated region
    $region26: #{tpu_custom_call.1} parent=1 // pred_check
      _
    $region27: #{tpu_custom_call.1} parent=1 // pred_check_branch
      %67 = sbr.rel (0) target = $region29
    $region28: #{tpu_custom_call.1} parent=1 // pred_region
      _
    $region29: #{tpu_custom_call.1} parent=1 // pred_fallthru
      _
    // Predicated region
    $region30: #{tpu_custom_call.1} parent=1 // pred_check
      _
    $region31: #{tpu_custom_call.1} parent=1 // pred_check_branch
      %69 = sbr.rel (0) target = $region33
    $region32: #{tpu_custom_call.1} parent=1 // pred_region
      %s71 = ssub.s32 3072, 3072
      %72 = vsyncadd [#allocation8], %s71
      %s73 = sshll.u32 [#allocation9], 4
      %s74 = int_to_ptr.vmem [resolvable:$true] %s73
      %79 = dma.hbm_to_vmem [thread:$0]  %s7, 3072, %s74, [#allocation8], 64, 64, 4
    $region33: #{tpu_custom_call.1} parent=1 // pred_fallthru
      _
    // Predicated region
    $region34: #{tpu_custom_call.1} parent=1 // pred_check
      _
    $region35: #{tpu_custom_call.1} parent=1 // pred_check_branch
      %81 = sbr.rel (0) target = $region37
    $region36: #{tpu_custom_call.1} parent=1 // pred_region
      _
    $region37: #{tpu_custom_call.1} parent=1 // pred_fallthru
      _
    // Predicated region
    $region38: #{tpu_custom_call.1} parent=1 // pred_check
      _
    $region39: #{tpu_custom_call.1} parent=1 // pred_check_branch
      %83 = sbr.rel (0) target = $region41
    $region40: #{tpu_custom_call.1} parent=1 // pred_region
      _
    $region41: #{tpu_custom_call.1} parent=1 // pred_fallthru
      _
    // Predicated region
    $region42: #{tpu_custom_call.1} parent=1 // pred_check
      _
    $region43: #{tpu_custom_call.1} parent=1 // pred_check_branch
      %85 = sbr.rel (0) target = $region45
    $region44: #{tpu_custom_call.1} parent=1 // pred_region
      %86 = dma.done [#allocation3], 64
    $region45: #{tpu_custom_call.1} parent=1 // pred_fallthru
      _
    // Predicated region
    $region46: #{tpu_custom_call.1} parent=1 // pred_check
      _
    $region47: #{tpu_custom_call.1} parent=1 // pred_check_branch
      %88 = sbr.rel (0) target = $region49
    $region48: #{tpu_custom_call.1} parent=1 // pred_region
      %89 = dma.done [#allocation5], 64
    $region49: #{tpu_custom_call.1} parent=1 // pred_fallthru
      _
    // Predicated region
    $region50: #{tpu_custom_call.1} parent=1 // pred_check
      _
    $region51: #{tpu_custom_call.1} parent=1 // pred_check_branch
      %91 = sbr.rel (0) target = $region53
    $region52: #{tpu_custom_call.1} parent=1 // pred_region
      %92 = dma.done [#allocation5], 512
    $region53: #{tpu_custom_call.1} parent=1 // pred_fallthru
      _
    // Predicated region
    $region54: #{tpu_custom_call.1} parent=1 // pred_check
      _
    $region55: #{tpu_custom_call.1} parent=1 // pred_check_branch
      %94 = sbr.rel (0) target = $region57
    $region56: #{tpu_custom_call.1} parent=1 // pred_region
      %95 = dma.done [#allocation8], 1024
    $region57: #{tpu_custom_call.1} parent=1 // pred_fallthru
      _
    // Predicated region
    $region58: #{tpu_custom_call.1} parent=1 // pred_check
      _
    $region59: #{tpu_custom_call.1} parent=1 // pred_check_branch
      %97 = sbr.rel (0) target = $region61
    $region60: #{tpu_custom_call.1} parent=1 // pred_region
      %98 = dma.done [#allocation8], 3072
    $region61: #{tpu_custom_call.1} parent=1 // pred_fallthru
      _
    %v100 = vld [vmem:[#allocation2] sm:$0xf]
    %v101 = vld [vmem:[#allocation6] sm:$0xf]
    %v102 = vld [vmem:[#allocation6 + $0x4] sm:$0xf]
    %v103 = vld [vmem:[#allocation6 + $0x8] sm:$0xf]
    %v104 = vld [vmem:[#allocation6 + $0xc] sm:$0xf]
    %v105 = vld [vmem:[#allocation6 + $0x10] sm:$0xf]
    %v106 = vld [vmem:[#allocation6 + $0x14] sm:$0xf]
    %v107 = vld [vmem:[#allocation6 + $0x18] sm:$0xf]
    %v108 = vld [vmem:[#allocation6 + $0x1c] sm:$0xf]
    %v109 = vld [vmem:[%s6] sm:$0x1]
    %v110 = vlaneseq
    %v111 = vshrl.u32 %v110, 7
    %v112 = vsub.s32 0, %v111
    %v113 = vrot.slane %v109, %v112
    %v122 = vunpack.c.l.b16 %v101
    %v123 = vunpack.c.l.b16 %v102
    %v124 = vunpack.c.l.b16 %v103
    %v125 = vunpack.c.l.b16 %v104
    %v126 = vunpack.c.l.b16 %v105
    %v127 = vunpack.c.l.b16 %v106
    %v128 = vunpack.c.l.b16 %v107
    %v129 = vunpack.c.l.b16 %v108
    %v130 = vpack.c.b16 %v123, %v122
    %v131 = vpack.c.b16 %v125, %v124
    %v132 = vpack.c.b16 %v127, %v126
    %v133 = vpack.c.b16 %v129, %v128
    %vm138 = vcmask 523264
    %v140 = vsel %vm138, %v100, 0
    %142 = vmatprep.subr.bf16.mxu0 0
    %143 = vmatpush1.bf16.msra.mxu0 %v130
    %144 = vmatprep.subr.bf16.mxu0 0
    %145 = vmatpush1.bf16.msra.mxu0 %v131
    %146 = vmatprep.subr.bf16.mxu0 0
    %147 = vmatpush1.bf16.msra.mxu0 %v132
    %148 = vmatprep.subr.bf16.mxu0 0
    %149 = vmatpush1.bf16.msra.mxu0 %v133
    %150 = vmatprep.subr.bf16.mxu0 0
    %151 = vmatpush1.bf16.msra.mxu0 0
    %152 = vmatprep.subr.bf16.mxu0 0
    %153 = vmatpush1.bf16.msra.mxu0 0
    %154 = vmatprep.subr.bf16.mxu0 0
    %155 = vmatpush1.bf16.msra.mxu0 0
    %156 = vmatprep.subr.bf16.mxu0 0
    %157 = vmatpush1.bf16.msra.mxu0 0
    %158 = vmatprep.subr.bf16.mxu0 0
    %159 = vmatpush1.bf16.msra.mxu0 0
    %160 = vmatprep.subr.bf16.mxu0 0
    %161 = vmatpush1.bf16.msra.mxu0 0
    %162 = vmatprep.subr.bf16.mxu0 0
    %163 = vmatpush1.bf16.msra.mxu0 0
    %164 = vmatprep.subr.bf16.mxu0 0
    %165 = vmatpush1.bf16.msra.mxu0 0
    %166 = vmatprep.subr.bf16.mxu0 0
    %167 = vmatpush1.bf16.msra.mxu0 0
    %168 = vmatprep.subr.bf16.mxu0 0
    %169 = vmatpush1.bf16.msra.mxu0 0
    %170 = vmatprep.subr.bf16.mxu0 0
    %171 = vmatpush1.bf16.msra.mxu0 0
    %172 = vmatprep.subr.bf16.mxu0 0
    %173 = vmatpush1.bf16.msra.mxu0 0
    %174 = vmatprep.mubr.bf16.mxu0 0
    %175 = vmatmul.mubr.bf16.gmra.mrb[0].mxu0 %v140
    %v176 = vpop.f32.mrb[0].mxu0
    %v177 = vadd.f32 %v113, %v176
    %v178 = vpop.f32.mrb[0].mxu0
    %v179 = vpop.f32.mrb[0].mxu0
    %v180 = vpop.f32.mrb[0].mxu0
    %181 = vdwg.mxu0
    %v182 = vmax.f32 %v177, 0.0
    %v183 = vld [vmem:[#allocation4] sm:$0xf]
    %v184 = vld [vmem:[#allocation7] sm:$0xf]
    %v185 = vld [vmem:[#allocation7 + $0x4] sm:$0xf]
    %v186 = vld [vmem:[#allocation7 + $0x8] sm:$0xf]
    %v187 = vld [vmem:[#allocation7 + $0xc] sm:$0xf]
    %v188 = vld [vmem:[#allocation7 + $0x10] sm:$0xf]
    %v189 = vld [vmem:[#allocation7 + $0x14] sm:$0xf]
    %v190 = vld [vmem:[#allocation7 + $0x18] sm:$0xf]
    %v191 = vld [vmem:[#allocation7 + $0x1c] sm:$0xf]
    %v192 = vld [vmem:[#allocation7 + $0x20] sm:$0xf]
    %v193 = vld [vmem:[#allocation7 + $0x24] sm:$0xf]
    %v194 = vld [vmem:[#allocation7 + $0x28] sm:$0xf]
    %v195 = vld [vmem:[#allocation7 + $0x2c] sm:$0xf]
    %v196 = vld [vmem:[#allocation7 + $0x30] sm:$0xf]
    %v197 = vld [vmem:[#allocation7 + $0x34] sm:$0xf]
    %v198 = vld [vmem:[#allocation7 + $0x38] sm:$0xf]
    %v199 = vld [vmem:[#allocation7 + $0x3c] sm:$0xf]
    %v200 = vld [vmem:[%s6 + $0x1] sm:$0x1]
    %v201 = vlaneseq
    %v202 = vshrl.u32 %v201, 7
    %v203 = vsub.s32 0, %v202
    %v204 = vrot.slane %v200, %v203
    %v221 = vunpack.c.l.b16 %v184
    %v222 = vunpack.c.l.b16 %v185
    %v223 = vunpack.c.l.b16 %v186
    %v224 = vunpack.c.l.b16 %v187
    %v225 = vunpack.c.l.b16 %v188
    %v226 = vunpack.c.l.b16 %v189
    %v227 = vunpack.c.l.b16 %v190
    %v228 = vunpack.c.l.b16 %v191
    %v229 = vunpack.c.l.b16 %v192
    %v230 = vunpack.c.l.b16 %v193
    %v231 = vunpack.c.l.b16 %v194
    %v232 = vunpack.c.l.b16 %v195
    %v233 = vunpack.c.l.b16 %v196
    %v234 = vunpack.c.l.b16 %v197
    %v235 = vunpack.c.l.b16 %v198
    %v236 = vunpack.c.l.b16 %v199
    %v237 = vpack.c.b16 %v222, %v221
    %v238 = vpack.c.b16 %v224, %v223
    %v239 = vpack.c.b16 %v226, %v225
    %v240 = vpack.c.b16 %v228, %v227
    %v241 = vpack.c.b16 %v230, %v229
    %v242 = vpack.c.b16 %v232, %v231
    %v243 = vpack.c.b16 %v234, %v233
    %v244 = vpack.c.b16 %v236, %v235
    %253 = vmatprep.subr.bf16.mxu0 0
    %254 = vmatpush1.bf16.msra.mxu0 %v237
    %255 = vmatprep.subr.bf16.mxu0 0
    %256 = vmatpush1.bf16.msra.mxu0 %v238
    %257 = vmatprep.subr.bf16.mxu0 0
    %258 = vmatpush1.bf16.msra.mxu0 %v239
    %259 = vmatprep.subr.bf16.mxu0 0
    %260 = vmatpush1.bf16.msra.mxu0 %v240
    %261 = vmatprep.subr.bf16.mxu0 0
    %262 = vmatpush1.bf16.msra.mxu0 %v241
    %263 = vmatprep.subr.bf16.mxu0 0
    %264 = vmatpush1.bf16.msra.mxu0 %v242
    %265 = vmatprep.subr.bf16.mxu0 0
    %266 = vmatpush1.bf16.msra.mxu0 %v243
    %267 = vmatprep.subr.bf16.mxu0 0
    %268 = vmatpush1.bf16.msra.mxu0 %v244
    %269 = vmatprep.subr.bf16.mxu0 0
    %270 = vmatpush1.bf16.msra.mxu0 0
    %271 = vmatprep.subr.bf16.mxu0 0
    %272 = vmatpush1.bf16.msra.mxu0 0
    %273 = vmatprep.subr.bf16.mxu0 0
    %274 = vmatpush1.bf16.msra.mxu0 0
    %275 = vmatprep.subr.bf16.mxu0 0
    %276 = vmatpush1.bf16.msra.mxu0 0
    %277 = vmatprep.subr.bf16.mxu0 0
    %278 = vmatpush1.bf16.msra.mxu0 0
    %279 = vmatprep.subr.bf16.mxu0 0
    %280 = vmatpush1.bf16.msra.mxu0 0
    %281 = vmatprep.subr.bf16.mxu0 0
    %282 = vmatpush1.bf16.msra.mxu0 0
    %283 = vmatprep.subr.bf16.mxu0 0
    %284 = vmatpush1.bf16.msra.mxu0 0
    %285 = vmatprep.mubr.bf16.mxu0 0
    %286 = vmatmul.mubr.bf16.gmra.mrb[0].mxu0 %v183
    %v287 = vpop.f32.mrb[0].mxu0
    %v288 = vadd.f32 %v204, %v287
    %v289 = vpop.f32.mrb[0].mxu0
    %v290 = vpop.f32.mrb[0].mxu0
    %v291 = vpop.f32.mrb[0].mxu0
    %292 = vdwg.mxu0
    %v293 = vmax.f32 %v288, 0.0
    %v294 = vld [vmem:[%s2] sm:$0xf]
    %v295 = vld [vmem:[%s5] sm:$0xf]
    %v296 = vld [vmem:[%s5 + $0x4] sm:$0xf]
    %v297 = vld [vmem:[%s6 + $0x2] sm:$0x1]
    %v298 = vlaneseq
    %v299 = vshrl.u32 %v298, 7
    %v300 = vsub.s32 0, %v299
    %v301 = vrot.slane %v297, %v300
    %v304 = vunpack.c.l.b16 %v295
    %v305 = vunpack.c.l.b16 %v296
    %v306 = vpack.c.b16 %v305, %v304
    %vm308 = vcmask 130048
    %v310 = vsel %vm308, %v294, 0
    %312 = vmatprep.subr.bf16.mxu0 0
    %313 = vmatpush1.bf16.msra.mxu0 %v306
    %314 = vmatprep.subr.bf16.mxu0 0
    %315 = vmatpush1.bf16.msra.mxu0 0
    %316 = vmatprep.subr.bf16.mxu0 0
    %317 = vmatpush1.bf16.msra.mxu0 0
    %318 = vmatprep.subr.bf16.mxu0 0
    %319 = vmatpush1.bf16.msra.mxu0 0
    %320 = vmatprep.subr.bf16.mxu0 0
    %321 = vmatpush1.bf16.msra.mxu0 0
    %322 = vmatprep.subr.bf16.mxu0 0
    %323 = vmatpush1.bf16.msra.mxu0 0
    %324 = vmatprep.subr.bf16.mxu0 0
    %325 = vmatpush1.bf16.msra.mxu0 0
    %326 = vmatprep.subr.bf16.mxu0 0
    %327 = vmatpush1.bf16.msra.mxu0 0
    %328 = vmatprep.subr.bf16.mxu0 0
    %329 = vmatpush1.bf16.msra.mxu0 0
    %330 = vmatprep.subr.bf16.mxu0 0
    %331 = vmatpush1.bf16.msra.mxu0 0
    %332 = vmatprep.subr.bf16.mxu0 0
    %333 = vmatpush1.bf16.msra.mxu0 0
    %334 = vmatprep.subr.bf16.mxu0 0
    %335 = vmatpush1.bf16.msra.mxu0 0
    %336 = vmatprep.subr.bf16.mxu0 0
    %337 = vmatpush1.bf16.msra.mxu0 0
    %338 = vmatprep.subr.bf16.mxu0 0
    %339 = vmatpush1.bf16.msra.mxu0 0
    %340 = vmatprep.subr.bf16.mxu0 0
    %341 = vmatpush1.bf16.msra.mxu0 0
    %342 = vmatprep.subr.bf16.mxu0 0
    %343 = vmatpush1.bf16.msra.mxu0 0
    %344 = vmatprep.mubr.bf16.mxu0 0
    %345 = vmatmul.mubr.bf16.gmra.mrb[0].mxu0 %v310
    %v346 = vpop.f32.mrb[0].mxu0
    %v347 = vadd.f32 %v301, %v346
    %v348 = vpop.f32.mrb[0].mxu0
    %v349 = vpop.f32.mrb[0].mxu0
    %v350 = vpop.f32.mrb[0].mxu0
    %351 = vdwg.mxu0
    %v352 = vmax.f32 %v347, 0.0
    %v353 = vpack.c.bf16 %v182, %v182
    %v354 = vld [vmem:[#allocation9] sm:$0xf]
    %v355 = vld [vmem:[#allocation9 + $0x4] sm:$0xf]
    %v356 = vld [vmem:[#allocation9 + $0x8] sm:$0xf]
    %v357 = vld [vmem:[#allocation9 + $0xc] sm:$0xf]
    %v358 = vld [vmem:[#allocation9 + $0x10] sm:$0xf]
    %v359 = vld [vmem:[#allocation9 + $0x14] sm:$0xf]
    %v360 = vld [vmem:[#allocation9 + $0x18] sm:$0xf]
    %v361 = vld [vmem:[#allocation9 + $0x1c] sm:$0xf]
    %v362 = vld [vmem:[#allocation9 + $0x20] sm:$0xf]
    %v363 = vld [vmem:[#allocation9 + $0x24] sm:$0xf]
    %v364 = vld [vmem:[#allocation9 + $0x28] sm:$0xf]
    %v365 = vld [vmem:[#allocation9 + $0x2c] sm:$0xf]
    %v366 = vld [vmem:[#allocation9 + $0x30] sm:$0xf]
    %v367 = vld [vmem:[#allocation9 + $0x34] sm:$0xf]
    %v368 = vld [vmem:[#allocation9 + $0x38] sm:$0xf]
    %v369 = vld [vmem:[#allocation9 + $0x3c] sm:$0xf]
    %v370 = vpack.c.bf16 %v293, %v293
    %v371 = vld [vmem:[#allocation9 + $0x40] sm:$0xf]
    %v372 = vld [vmem:[#allocation9 + $0x44] sm:$0xf]
    %v373 = vld [vmem:[#allocation9 + $0x48] sm:$0xf]
    %v374 = vld [vmem:[#allocation9 + $0x4c] sm:$0xf]
    %v375 = vld [vmem:[#allocation9 + $0x50] sm:$0xf]
    %v376 = vld [vmem:[#allocation9 + $0x54] sm:$0xf]
    %v377 = vld [vmem:[#allocation9 + $0x58] sm:$0xf]
    %v378 = vld [vmem:[#allocation9 + $0x5c] sm:$0xf]
    %v379 = vld [vmem:[#allocation9 + $0x60] sm:$0xf]
    %v380 = vld [vmem:[#allocation9 + $0x64] sm:$0xf]
    %v381 = vld [vmem:[#allocation9 + $0x68] sm:$0xf]
    %v382 = vld [vmem:[#allocation9 + $0x6c] sm:$0xf]
    %v383 = vld [vmem:[#allocation9 + $0x70] sm:$0xf]
    %v384 = vld [vmem:[#allocation9 + $0x74] sm:$0xf]
    %v385 = vld [vmem:[#allocation9 + $0x78] sm:$0xf]
    %v386 = vld [vmem:[#allocation9 + $0x7c] sm:$0xf]
    %v403 = vunpack.c.l.b16 %v371
    %v404 = vunpack.c.l.b16 %v372
    %v405 = vunpack.c.l.b16 %v373
    %v406 = vunpack.c.l.b16 %v374
    %v407 = vunpack.c.l.b16 %v375
    %v408 = vunpack.c.l.b16 %v376
    %v409 = vunpack.c.l.b16 %v377
    %v410 = vunpack.c.l.b16 %v378
    %v411 = vunpack.c.l.b16 %v379
    %v412 = vunpack.c.l.b16 %v380
    %v413 = vunpack.c.l.b16 %v381
    %v414 = vunpack.c.l.b16 %v382
    %v415 = vunpack.c.l.b16 %v383
    %v416 = vunpack.c.l.b16 %v384
    %v417 = vunpack.c.l.b16 %v385
    %v418 = vunpack.c.l.b16 %v386
    %v419 = vpack.c.b16 %v404, %v403
    %v420 = vpack.c.b16 %v406, %v405
    %v421 = vpack.c.b16 %v408, %v407
    %v422 = vpack.c.b16 %v410, %v409
    %v423 = vpack.c.b16 %v412, %v411
    %v424 = vpack.c.b16 %v414, %v413
    %v425 = vpack.c.b16 %v416, %v415
    %v426 = vpack.c.b16 %v418, %v417
    %435 = vmatprep.subr.bf16.mxu0 0
    %436 = vmatpush1.bf16.msra.mxu0 %v419
    %437 = vmatprep.subr.bf16.mxu0 0
    %438 = vmatpush1.bf16.msra.mxu0 %v420
    %439 = vmatprep.subr.bf16.mxu0 0
    %440 = vmatpush1.bf16.msra.mxu0 %v421
    %441 = vmatprep.subr.bf16.mxu0 0
    %442 = vmatpush1.bf16.msra.mxu0 %v422
    %443 = vmatprep.subr.bf16.mxu0 0
    %444 = vmatpush1.bf16.msra.mxu0 %v423
    %445 = vmatprep.subr.bf16.mxu0 0
    %446 = vmatpush1.bf16.msra.mxu0 %v424
    %447 = vmatprep.subr.bf16.mxu0 0
    %448 = vmatpush1.bf16.msra.mxu0 %v425
    %449 = vmatprep.subr.bf16.mxu0 0
    %450 = vmatpush1.bf16.msra.mxu0 %v426
    %451 = vmatprep.subr.bf16.mxu0 0
    %452 = vmatpush1.bf16.msra.mxu0 0
    %453 = vmatprep.subr.bf16.mxu0 0
    %454 = vmatpush1.bf16.msra.mxu0 0
    %455 = vmatprep.subr.bf16.mxu0 0
    %456 = vmatpush1.bf16.msra.mxu0 0
    %457 = vmatprep.subr.bf16.mxu0 0
    %458 = vmatpush1.bf16.msra.mxu0 0
    %459 = vmatprep.subr.bf16.mxu0 0
    %460 = vmatpush1.bf16.msra.mxu0 0
    %461 = vmatprep.subr.bf16.mxu0 0
    %462 = vmatpush1.bf16.msra.mxu0 0
    %463 = vmatprep.subr.bf16.mxu0 0
    %464 = vmatpush1.bf16.msra.mxu0 0
    %465 = vmatprep.subr.bf16.mxu0 0
    %466 = vmatpush1.bf16.msra.mxu0 0
    %467 = vmatprep.mubr.bf16.mxu0 0
    %468 = vmatmul.mubr.bf16.gmra.mrb[0].mxu0 %v370
    %v469 = vpop.f32.mrb[0].mxu0
    %v470 = vadd.f32 0.0, %v469
    %v471 = vpop.f32.mrb[0].mxu0
    %v472 = vpop.f32.mrb[0].mxu0
    %v473 = vpop.f32.mrb[0].mxu0
    %474 = vdwg.mxu0
    %v491 = vunpack.c.l.b16 %v354
    %v492 = vunpack.c.l.b16 %v355
    %v493 = vunpack.c.l.b16 %v356
    %v494 = vunpack.c.l.b16 %v357
    %v495 = vunpack.c.l.b16 %v358
    %v496 = vunpack.c.l.b16 %v359
    %v497 = vunpack.c.l.b16 %v360
    %v498 = vunpack.c.l.b16 %v361
    %v499 = vunpack.c.l.b16 %v362
    %v500 = vunpack.c.l.b16 %v363
    %v501 = vunpack.c.l.b16 %v364
    %v502 = vunpack.c.l.b16 %v365
    %v503 = vunpack.c.l.b16 %v366
    %v504 = vunpack.c.l.b16 %v367
    %v505 = vunpack.c.l.b16 %v368
    %v506 = vunpack.c.l.b16 %v369
    %v507 = vpack.c.b16 %v492, %v491
    %v508 = vpack.c.b16 %v494, %v493
    %v509 = vpack.c.b16 %v496, %v495
    %v510 = vpack.c.b16 %v498, %v497
    %v511 = vpack.c.b16 %v500, %v499
    %v512 = vpack.c.b16 %v502, %v501
    %v513 = vpack.c.b16 %v504, %v503
    %v514 = vpack.c.b16 %v506, %v505
    %523 = vmatprep.subr.bf16.mxu0 0
    %524 = vmatpush1.bf16.msra.mxu0 %v507
    %525 = vmatprep.subr.bf16.mxu0 0
    %526 = vmatpush1.bf16.msra.mxu0 %v508
    %527 = vmatprep.subr.bf16.mxu0 0
    %528 = vmatpush1.bf16.msra.mxu0 %v509
    %529 = vmatprep.subr.bf16.mxu0 0
    %530 = vmatpush1.bf16.msra.mxu0 %v510
    %531 = vmatprep.subr.bf16.mxu0 0
    %532 = vmatpush1.bf16.msra.mxu0 %v511
    %533 = vmatprep.subr.bf16.mxu0 0
    %534 = vmatpush1.bf16.msra.mxu0 %v512
    %535 = vmatprep.subr.bf16.mxu0 0
    %536 = vmatpush1.bf16.msra.mxu0 %v513
    %537 = vmatprep.subr.bf16.mxu0 0
    %538 = vmatpush1.bf16.msra.mxu0 %v514
    %539 = vmatprep.subr.bf16.mxu0 0
    %540 = vmatpush1.bf16.msra.mxu0 0
    %541 = vmatprep.subr.bf16.mxu0 0
    %542 = vmatpush1.bf16.msra.mxu0 0
    %543 = vmatprep.subr.bf16.mxu0 0
    %544 = vmatpush1.bf16.msra.mxu0 0
    %545 = vmatprep.subr.bf16.mxu0 0
    %546 = vmatpush1.bf16.msra.mxu0 0
    %547 = vmatprep.subr.bf16.mxu0 0
    %548 = vmatpush1.bf16.msra.mxu0 0
    %549 = vmatprep.subr.bf16.mxu0 0
    %550 = vmatpush1.bf16.msra.mxu0 0
    %551 = vmatprep.subr.bf16.mxu0 0
    %552 = vmatpush1.bf16.msra.mxu0 0
    %553 = vmatprep.subr.bf16.mxu0 0
    %554 = vmatpush1.bf16.msra.mxu0 0
    %555 = vmatprep.mubr.bf16.mxu0 0
    %556 = vmatmul.mubr.bf16.gmra.mrb[0].mxu0 %v353
    %v557 = vpop.f32.mrb[0].mxu0
    %v558 = vadd.f32 %v470, %v557
    %v559 = vpop.f32.mrb[0].mxu0
    %v560 = vpop.f32.mrb[0].mxu0
    %v561 = vpop.f32.mrb[0].mxu0
    %562 = vdwg.mxu0
    %v563 = vpack.c.bf16 %v352, %v352
    %v564 = vld [vmem:[#allocation9 + $0x80] sm:$0xf]
    %v565 = vld [vmem:[#allocation9 + $0x84] sm:$0xf]
    %v566 = vld [vmem:[#allocation9 + $0x88] sm:$0xf]
    %v567 = vld [vmem:[#allocation9 + $0x8c] sm:$0xf]
    %v568 = vld [vmem:[#allocation9 + $0x90] sm:$0xf]
    %v569 = vld [vmem:[#allocation9 + $0x94] sm:$0xf]
    %v570 = vld [vmem:[#allocation9 + $0x98] sm:$0xf]
    %v571 = vld [vmem:[#allocation9 + $0x9c] sm:$0xf]
    %v572 = vld [vmem:[#allocation9 + $0xa0] sm:$0xf]
    %v573 = vld [vmem:[#allocation9 + $0xa4] sm:$0xf]
    %v574 = vld [vmem:[#allocation9 + $0xa8] sm:$0xf]
    %v575 = vld [vmem:[#allocation9 + $0xac] sm:$0xf]
    %v576 = vld [vmem:[#allocation9 + $0xb0] sm:$0xf]
    %v577 = vld [vmem:[#allocation9 + $0xb4] sm:$0xf]
    %v578 = vld [vmem:[#allocation9 + $0xb8] sm:$0xf]
    %v579 = vld [vmem:[#allocation9 + $0xbc] sm:$0xf]
    %v596 = vunpack.c.l.b16 %v564
    %v597 = vunpack.c.l.b16 %v565
    %v598 = vunpack.c.l.b16 %v566
    %v599 = vunpack.c.l.b16 %v567
    %v600 = vunpack.c.l.b16 %v568
    %v601 = vunpack.c.l.b16 %v569
    %v602 = vunpack.c.l.b16 %v570
    %v603 = vunpack.c.l.b16 %v571
    %v604 = vunpack.c.l.b16 %v572
    %v605 = vunpack.c.l.b16 %v573
    %v606 = vunpack.c.l.b16 %v574
    %v607 = vunpack.c.l.b16 %v575
    %v608 = vunpack.c.l.b16 %v576
    %v609 = vunpack.c.l.b16 %v577
    %v610 = vunpack.c.l.b16 %v578
    %v611 = vunpack.c.l.b16 %v579
    %v612 = vpack.c.b16 %v597, %v596
    %v613 = vpack.c.b16 %v599, %v598
    %v614 = vpack.c.b16 %v601, %v600
    %v615 = vpack.c.b16 %v603, %v602
    %v616 = vpack.c.b16 %v605, %v604
    %v617 = vpack.c.b16 %v607, %v606
    %v618 = vpack.c.b16 %v609, %v608
    %v619 = vpack.c.b16 %v611, %v610
    %628 = vmatprep.subr.bf16.mxu0 0
    %629 = vmatpush1.bf16.msra.mxu0 %v612
    %630 = vmatprep.subr.bf16.mxu0 0
    %631 = vmatpush1.bf16.msra.mxu0 %v613
    %632 = vmatprep.subr.bf16.mxu0 0
    %633 = vmatpush1.bf16.msra.mxu0 %v614
    %634 = vmatprep.subr.bf16.mxu0 0
    %635 = vmatpush1.bf16.msra.mxu0 %v615
    %636 = vmatprep.subr.bf16.mxu0 0
    %637 = vmatpush1.bf16.msra.mxu0 %v616
    %638 = vmatprep.subr.bf16.mxu0 0
    %639 = vmatpush1.bf16.msra.mxu0 %v617
    %640 = vmatprep.subr.bf16.mxu0 0
    %641 = vmatpush1.bf16.msra.mxu0 %v618
    %642 = vmatprep.subr.bf16.mxu0 0
    %643 = vmatpush1.bf16.msra.mxu0 %v619
    %644 = vmatprep.subr.bf16.mxu0 0
    %645 = vmatpush1.bf16.msra.mxu0 0
    %646 = vmatprep.subr.bf16.mxu0 0
    %647 = vmatpush1.bf16.msra.mxu0 0
    %648 = vmatprep.subr.bf16.mxu0 0
    %649 = vmatpush1.bf16.msra.mxu0 0
    %650 = vmatprep.subr.bf16.mxu0 0
    %651 = vmatpush1.bf16.msra.mxu0 0
    %652 = vmatprep.subr.bf16.mxu0 0
    %653 = vmatpush1.bf16.msra.mxu0 0
    %654 = vmatprep.subr.bf16.mxu0 0
    %655 = vmatpush1.bf16.msra.mxu0 0
    %656 = vmatprep.subr.bf16.mxu0 0
    %657 = vmatpush1.bf16.msra.mxu0 0
    %658 = vmatprep.subr.bf16.mxu0 0
    %659 = vmatpush1.bf16.msra.mxu0 0
    %660 = vmatprep.mubr.bf16.mxu0 0
    %661 = vmatmul.mubr.bf16.gmra.mrb[0].mxu0 %v563
    %v662 = vpop.f32.mrb[0].mxu0
    %v663 = vadd.f32 0.0, %v662
    %v664 = vpop.f32.mrb[0].mxu0
    %v665 = vpop.f32.mrb[0].mxu0
    %v666 = vpop.f32.mrb[0].mxu0
    %667 = vdwg.mxu0
    %v668 = vadd.f32 %v558, %v663
    %v669 = vld [vmem:[%s8] sm:$0x1]
    %v671 = vlaneseq
    %v672 = vshrl.u32 %v671, 7
    %v673 = vsub.s32 0, %v672
    %v674 = vrot.slane %v669, %v673
    %v676 = vadd.f32 %v668, %v674
    %v677 = vmax.f32 %v676, 0.0
    %v678 = vld [vmem:[%s9] sm:$0x1]
    %v680 = vlaneseq
    %v681 = vshrl.u32 %v680, 7
    %v682 = vsub.s32 0, %v681
    %v683 = vrot.slane %v678, %v682
    %v685 = vmul.f32 %v677, %v683
    %686 = vadd.xlane.f32.xlu0 %v685
    %v687 = vpop.xlane.xlu0 %686
    %vm688 = vcmask 7168
    %689 = vst.msk [vmem:[%s10] sm:$0xff] %vm688, %v687
    // Predicated region
    $region62: #{tpu_custom_call.1} parent=1 // pred_check
      _
    $region63: #{tpu_custom_call.1} parent=1 // pred_check_branch
      %691 = sbr.rel (0) target = $region65
    $region64: #{tpu_custom_call.1} parent=1 // pred_region
      _
    $region65: #{tpu_custom_call.1} parent=1 // pred_fallthru
      _
    // Predicated region
    $region66: #{tpu_custom_call.1} parent=1 // pred_check
      _
    $region67: #{tpu_custom_call.1} parent=1 // pred_check_branch
      %693 = sbr.rel (0) target = $region69
    $region68: #{tpu_custom_call.1} parent=1 // pred_region
      _
    $region69: #{tpu_custom_call.1} parent=1 // pred_fallthru
      _
    %694 = vsyncpa [#allocation3], 1
    %695 = vsyncpa [#allocation5], 1
    %696 = vsyncpa [#allocation8], 1

</llo_original>
